<compile_context>
chip_gen: v6e
topology: v6e:2x2x1
jax: 0.10.0
libtpu: 0.0.40
codegen_flags: <defaults>
</compile_context>

<pallas_src>
import jax
import jax.numpy as jnp
from jax.experimental import pallas as pl
from jax.experimental.pallas import tpu as pltpu


def _round_up(x, m):
    return (x + m - 1) // m * m


def edge_decoder_kernel(row_ref, col_ref, sat_ref, sbt_ref, w2t_ref, b2_ref,
                        o_ref):
    # sat_ref: (H, ns)  = (z_src @ W1a + b1)^T   (precomputed in wrapper)
    # sbt_ref: (H, nd)  = (z_dst @ W1b)^T
    # row_ref/col_ref: (1, 1, tile_e) int32 edge ids (lane-dense)
    ns = sat_ref.shape[1]
    nd = sbt_ref.shape[1]
    te = row_ref.shape[-1]

    # Gather-as-matmul with the edge tile on the MXU lane axis.  Sequenced so
    # only one (N, tile_e) one-hot is live at a time.
    onehot_r = (jax.lax.broadcasted_iota(jnp.int32, (ns, te), 0)
                == row_ref[0]).astype(jnp.float32)                    # (ns, te)
    h = jnp.dot(sat_ref[...], onehot_r,
                preferred_element_type=jnp.float32)                    # (H, te)

    onehot_c = (jax.lax.broadcasted_iota(jnp.int32, (nd, te), 0)
                == col_ref[0]).astype(jnp.float32)                    # (nd, te)
    h = h + jnp.dot(sbt_ref[...], onehot_c,
                    preferred_element_type=jnp.float32)                # (H, te)

    h = jnp.maximum(h, 0.0)            # relu; b1 already folded into sa

    # lin2: (1, H) @ (H, te) -> (1, te), lane-dense output.
    logits = jnp.dot(w2t_ref[...], h, preferred_element_type=jnp.float32)
    o_ref[0] = (logits + b2_ref[0, 0]).astype(o_ref.dtype)


def edge_decoder(z_src, z_dst, edge_label_index, params, *, tile_e=1024):
    """Pallas EdgeDecoder forward.

    z_src: (N_src, H), z_dst: (N_dst, H)
    edge_label_index: (2, E) int32
    params: dict with w1 (2H, H) [= torch lin1.weight.T], b1 (H,),
                      w2 (H, 1)  [= torch lin2.weight.T], b2 (1,)
    returns: (E, 1) f32
    """
    H = z_src.shape[-1]
    row = edge_label_index[0].astype(jnp.int32)
    col = edge_label_index[1].astype(jnp.int32)
    E = row.shape[0]

    # Edge tiling: multiple of 128 (lane-dense), padded internally.  Clamp so
    # there are >= 2 grid steps whenever E allows (v7x has 2 TCs; a 1-step
    # "parallel" grid would leave one idle).
    tile_e = _round_up(max(int(tile_e), 128), 128)
    tile_e = min(tile_e, _round_up(pl.cdiv(E, 2), 128))
    e_pad = _round_up(E, tile_e)
    n_tiles = e_pad // tile_e

    # Lane-dense id tiles: (n_tiles, 1, tile_e).  Padded edges use index 0 and
    # are sliced away at the end.
    row_p = jnp.zeros((e_pad,), jnp.int32).at[:E].set(row).reshape(
        n_tiles, 1, tile_e)
    col_p = jnp.zeros((e_pad,), jnp.int32).at[:E].set(col).reshape(
        n_tiles, 1, tile_e)

    # Hoisted node-level matmuls (done ONCE, outside the sequential grid).
    w1a = params["w1"][:H, :].astype(jnp.float32)   # acts on z_src half
    w1b = params["w1"][H:, :].astype(jnp.float32)   # acts on z_dst half
    b1 = params["b1"].reshape(1, H).astype(jnp.float32)
    sa = z_src.astype(jnp.float32) @ w1a + b1        # (N_src, H), b1 folded in
    sb = z_dst.astype(jnp.float32) @ w1b             # (N_dst, H)

    # Pad node axis to a multiple of 8 (one-hot sublane axis); padded node
    # rows are never selected.  Pre-transpose so the kernel does plain matmuls.
    ns = _round_up(sa.shape[0], 8)
    nd = _round_up(sb.shape[0], 8)
    sa_t = jnp.zeros((H, ns), jnp.float32).at[:, :sa.shape[0]].set(sa.T)
    sb_t = jnp.zeros((H, nd), jnp.float32).at[:, :sb.shape[0]].set(sb.T)

    w2t = params["w2"].reshape(1, H).astype(jnp.float32)   # (1, H) == W2^T
    b2 = params["b2"].reshape(1, 1).astype(jnp.float32)    # SMEM scalar

    # Rough VMEM budget: residents + one-hot temporaries + h + streamed tiles.
    est = ((ns + nd + 2) * H * 4                 # sa_t, sb_t, w2t, h row
           + 2 * tile_e * max(ns, nd) * 4        # one-hot temporaries (peak)
           + 2 * tile_e * H * 4                  # h / logits temporaries
           + 4 * 2 * 8 * tile_e * 4)             # double-buffered id/out tiles
    vmem_limit = int(min(64 * 1024 * 1024, max(32 * 1024 * 1024, 2 * est)))

    out = pl.pallas_call(
        edge_decoder_kernel,
        out_shape=jax.ShapeDtypeStruct((n_tiles, 1, tile_e), jnp.float32),
        grid_spec=pltpu.PrefetchScalarGridSpec(
            num_scalar_prefetch=0,
            grid=(n_tiles,),
            in_specs=[
                pl.BlockSpec((1, 1, tile_e), lambda i: (i, 0, 0)),  # row ids
                pl.BlockSpec((1, 1, tile_e), lambda i: (i, 0, 0)),  # col ids
                pl.BlockSpec((H, ns), lambda i: (0, 0)),            # sa^T resident
                pl.BlockSpec((H, nd), lambda i: (0, 0)),            # sb^T resident
                pl.BlockSpec((1, H), lambda i: (0, 0)),             # W2^T
                pl.BlockSpec(memory_space=pltpu.MemorySpace.SMEM),  # b2 scalar
            ],
            out_specs=pl.BlockSpec((1, 1, tile_e), lambda i: (i, 0, 0)),
        ),
        compiler_params=pltpu.CompilerParams(
            dimension_semantics=("parallel",),
            vmem_limit_bytes=vmem_limit),
    )(row_p, col_p, sa_t, sb_t, w2t, b2)

    return out.reshape(e_pad)[:E].reshape(E, 1)


def init_params(key, hidden_channels):
    """Deterministic synthetic parameters matching torch Linear shapes."""
    H = hidden_channels
    k1, k2, k3, k4 = jax.random.split(key, 4)
    # torch lin1: weight (H, 2H), bias (H); we store the transpose (2H, H).
    w1 = jax.random.normal(k1, (2 * H, H), jnp.float32) * 0.1
    b1 = jax.random.normal(k2, (H,), jnp.float32) * 0.1
    # torch lin2: weight (1, H), bias (1); we store the transpose (H, 1).
    w2 = jax.random.normal(k3, (H, 1), jnp.float32) * 0.1
    b2 = jax.random.normal(k4, (1,), jnp.float32) * 0.1
    return {"w1": w1, "b1": b1, "w2": w2, "b2": b2}


def edge_decoder_ref(z_src, z_dst, edge_label_index, params):
    row, col = edge_label_index[0], edge_label_index[1]
    z = jnp.concatenate([z_src[row], z_dst[col]], axis=-1)
    z = jnp.maximum(z @ params["w1"] + params["b1"], 0.0)
    return z @ params["w2"] + params["b2"]


if __name__ == "__main__":
    H = 32              # hidden_channels
    N_SRC, N_DST = 24, 20
    E = 500             # number of edges (deliberately NOT a tile multiple)

    key = jax.random.PRNGKey(0)
    k_src, k_dst, k_row, k_col, k_par = jax.random.split(key, 5)

    z_src = jax.random.normal(k_src, (N_SRC, H), jnp.float32)
    z_dst = jax.random.normal(k_dst, (N_DST, H), jnp.float32)
    edge_label_index = jnp.stack([
        jax.random.randint(k_row, (E,), 0, N_SRC, dtype=jnp.int32),
        jax.random.randint(k_col, (E,), 0, N_DST, dtype=jnp.int32),
    ], axis=0)
    params = init_params(k_par, H)

    # Default tile_e: the internal clamp yields tile_e=256, n_tiles=2 here, so
    # the demo exercises a multi-step grid + internal edge padding.
    out = edge_decoder(z_src, z_dst, edge_label_index, params)
    out = jax.block_until_ready(out)

    ref = edge_decoder_ref(z_src, z_dst, edge_label_index, params)
    assert out.shape == (E, 1)
    # Slightly relaxed tolerance: MXU f32 matmuls accumulate in a different
    # order (W1 split + on-chip one-hot gather) than the XLA reference.
    assert jnp.allclose(out, ref, atol=1e-4, rtol=1e-4)

    print("KERNEL_OK")
</pallas_src>

<mosaic_0001>
module attributes {stable_mosaic.version = 11 : i64} {
  func.func @edge_decoder_kernel(%arg0: i32, %arg1: memref<1x1x256xi32, #tpu.memory_space<vmem>>, %arg2: memref<1x1x256xi32, #tpu.memory_space<vmem>>, %arg3: memref<32x24xf32, #tpu.memory_space<vmem>>, %arg4: memref<32x24xf32, #tpu.memory_space<vmem>>, %arg5: memref<1x32xf32, #tpu.memory_space<vmem>>, %arg6: memref<1x1xf32, #tpu.memory_space<smem>>, %arg7: memref<1x1x256xf32, #tpu.memory_space<vmem>>) attributes {dimension_semantics = [#tpu.dimension_semantics<parallel>], iteration_bounds = array<i64: 2>, scalar_prefetch = 0 : i64, scratch_operands = 0 : i64, tpu.core_type = #tpu.core_type<tc>, window_params = [{transform_indices = @transform_0, window_bounds = array<i64: 1, 1, 256>}, {transform_indices = @transform_1, window_bounds = array<i64: 1, 1, 256>}, {pipeline_mode = #tpu.pipeline_mode<synchronous>, transform_indices = @transform_2, window_bounds = array<i64: 32, 24>}, {pipeline_mode = #tpu.pipeline_mode<synchronous>, transform_indices = @transform_3, window_bounds = array<i64: 32, 24>}, {pipeline_mode = #tpu.pipeline_mode<synchronous>, transform_indices = @transform_4, window_bounds = array<i64: 1, 32>}, {transform_indices = @transform_5, window_bounds = array<i64: 1, 1>}, {transform_indices = @transform_6, window_bounds = array<i64: 1, 1, 256>}]} {
    %0 = tpu.iota {dimensions = array<i32: 0>} : vector<24x256xi32>
    %c0 = arith.constant 0 : index
    %c0_0 = arith.constant 0 : index
    %c0_1 = arith.constant 0 : index
    %1 = vector.load %arg1[%c0, %c0_0, %c0_1] : memref<1x1x256xi32, #tpu.memory_space<vmem>>, vector<1x1x256xi32>
    %2 = vector.shape_cast %1 : vector<1x1x256xi32> to vector<1x256xi32>
    %3 = vector.broadcast %2 : vector<1x256xi32> to vector<24x256xi32>
    %4 = arith.cmpi eq, %0, %3 : vector<24x256xi32>
    %5 = arith.extui %4 : vector<24x256xi1> to vector<24x256xi32>
    %6 = arith.sitofp %5 : vector<24x256xi32> to vector<24x256xf32>
    %c0_2 = arith.constant 0 : index
    %c0_3 = arith.constant 0 : index
    %7 = vector.load %arg3[%c0_2, %c0_3] : memref<32x24xf32, #tpu.memory_space<vmem>>, vector<32x24xf32>
    %cst = arith.constant dense<0.000000e+00> : vector<32x256xf32>
    %8 = tpu.matmul %7, %6, %cst {dimension_numbers = #tpu.dot_dimension_numbers<[1], [0], [0], [1], [0, 0, 1, 1], [], []>} : vector<32x24xf32>, vector<24x256xf32>, vector<32x256xf32> -> vector<32x256xf32>
    %9 = tpu.iota {dimensions = array<i32: 0>} : vector<24x256xi32>
    %c0_4 = arith.constant 0 : index
    %c0_5 = arith.constant 0 : index
    %c0_6 = arith.constant 0 : index
    %10 = vector.load %arg2[%c0_4, %c0_5, %c0_6] : memref<1x1x256xi32, #tpu.memory_space<vmem>>, vector<1x1x256xi32>
    %11 = vector.shape_cast %10 : vector<1x1x256xi32> to vector<1x256xi32>
    %12 = vector.broadcast %11 : vector<1x256xi32> to vector<24x256xi32>
    %13 = arith.cmpi eq, %9, %12 : vector<24x256xi32>
    %14 = arith.extui %13 : vector<24x256xi1> to vector<24x256xi32>
    %15 = arith.sitofp %14 : vector<24x256xi32> to vector<24x256xf32>
    %c0_7 = arith.constant 0 : index
    %c0_8 = arith.constant 0 : index
    %16 = vector.load %arg4[%c0_7, %c0_8] : memref<32x24xf32, #tpu.memory_space<vmem>>, vector<32x24xf32>
    %cst_9 = arith.constant dense<0.000000e+00> : vector<32x256xf32>
    %17 = tpu.matmul %16, %15, %cst_9 {dimension_numbers = #tpu.dot_dimension_numbers<[1], [0], [0], [1], [0, 0, 1, 1], [], []>} : vector<32x24xf32>, vector<24x256xf32>, vector<32x256xf32> -> vector<32x256xf32>
    %18 = arith.addf %8, %17 : vector<32x256xf32>
    %cst_10 = arith.constant 0.000000e+00 : f32
    %19 = vector.broadcast %cst_10 : f32 to vector<32x256xf32>
    %20 = arith.maximumf %18, %19 : vector<32x256xf32>
    %c0_11 = arith.constant 0 : index
    %c0_12 = arith.constant 0 : index
    %21 = vector.load %arg5[%c0_11, %c0_12] : memref<1x32xf32, #tpu.memory_space<vmem>>, vector<1x32xf32>
    %cst_13 = arith.constant dense<0.000000e+00> : vector<1x256xf32>
    %22 = tpu.matmul %21, %20, %cst_13 {dimension_numbers = #tpu.dot_dimension_numbers<[1], [0], [0], [1], [0, 0, 1, 1], [], []>} : vector<1x32xf32>, vector<32x256xf32>, vector<1x256xf32> -> vector<1x256xf32>
    %c0_14 = arith.constant 0 : index
    %c0_15 = arith.constant 0 : index
    %23 = memref.load %arg6[%c0_14, %c0_15] : memref<1x1xf32, #tpu.memory_space<smem>>
    %24 = vector.broadcast %23 : f32 to vector<1x256xf32>
    %25 = arith.addf %22, %24 : vector<1x256xf32>
    %c0_16 = arith.constant 0 : index
    %c0_17 = arith.constant 0 : index
    %c0_18 = arith.constant 0 : index
    %26 = vector.load %arg7[%c0_16, %c0_17, %c0_18] : memref<1x1x256xf32, #tpu.memory_space<vmem>>, vector<1x1x256xf32>
    %27 = vector.shape_cast %26 : vector<1x1x256xf32> to vector<1x256xf32>
    %28 = vector.shape_cast %25 : vector<1x256xf32> to vector<1x1x256xf32>
    tpu.vector_store %arg7[%c0_16, %c0_17, %c0_18], %28 {strides = array<i32>} : memref<1x1x256xf32, #tpu.memory_space<vmem>>, vector<1x1x256xf32>,
    return
  }
  func.func @transform_0(%arg0: i32) -> (i32, i32, i32) {
    %c0_i32 = arith.constant 0 : i32
    %c0_i32_0 = arith.constant 0 : i32
    %c0_i32_1 = arith.constant 0 : i32
    return %arg0, %c0_i32, %c0_i32_0 : i32, i32, i32
  }
  func.func @transform_1(%arg0: i32) -> (i32, i32, i32) {
    %c0_i32 = arith.constant 0 : i32
    %c0_i32_0 = arith.constant 0 : i32
    %c0_i32_1 = arith.constant 0 : i32
    return %arg0, %c0_i32, %c0_i32_0 : i32, i32, i32
  }
  func.func @transform_2(%arg0: i32) -> (i32, i32) {
    %c0_i32 = arith.constant 0 : i32
    %c0_i32_0 = arith.constant 0 : i32
    %c0_i32_1 = arith.constant 0 : i32
    return %c0_i32, %c0_i32_0 : i32, i32
  }
  func.func @transform_3(%arg0: i32) -> (i32, i32) {
    %c0_i32 = arith.constant 0 : i32
    %c0_i32_0 = arith.constant 0 : i32
    %c0_i32_1 = arith.constant 0 : i32
    return %c0_i32, %c0_i32_0 : i32, i32
  }
  func.func @transform_4(%arg0: i32) -> (i32, i32) {
    %c0_i32 = arith.constant 0 : i32
    %c0_i32_0 = arith.constant 0 : i32
    %c0_i32_1 = arith.constant 0 : i32
    return %c0_i32, %c0_i32_0 : i32, i32
  }
  func.func @transform_5(%arg0: i32) -> (i32, i32) {
    %c0_i32 = arith.constant 0 : i32
    %c0_i32_0 = arith.constant 0 : i32
    %c0_i32_1 = arith.constant 0 : i32
    return %c0_i32, %c0_i32_0 : i32, i32
  }
  func.func @transform_6(%arg0: i32) -> (i32, i32, i32) {
    %c0_i32 = arith.constant 0 : i32
    %c0_i32_0 = arith.constant 0 : i32
    %c0_i32_1 = arith.constant 0 : i32
    return %arg0, %c0_i32, %c0_i32_0 : i32, i32, i32
  }
}

</mosaic_0001>

<llo_original>
// kernel: tpu_custom_call.1
$region0: #{tpu_custom_call.1}
  #allocation0 [shape = 'u32[]', space=smem, size = 0x4, offset = 0x4, fixed_abs, tag = 'smem constant byte address 0x4 - core index']
  #allocation1 [shape = 'u32[144,128]{1,0:T(1,128)}', space=vmem, size = 0x12000, scoped, tag = 'internal scratch']
  #allocation2 [shape = 'f32[1,1]{1,0:T(1,128)S(6)}', space=smem, size = 0x200, scoped, tag = 'scoped memory for tpu_custom_call.1']
  %s0 = inlined_call_operand.vmem [shape: s32[2,1,256], index: 0, kind: input, shape index: {}]
  %s1 = inlined_call_operand.vmem [shape: s32[2,1,256], index: 1, kind: input, shape index: {}]
  %s2 = inlined_call_operand.vmem [shape: f32[32,24], index: 2, kind: input, shape index: {}]
  %s3 = inlined_call_operand.vmem [shape: f32[32,24], index: 3, kind: input, shape index: {}]
  %s4 = inlined_call_operand.vmem [shape: f32[1,32], index: 4, kind: input, shape index: {}]
  %s5 = inlined_call_operand.<no memory space> [shape: f32[1,1], index: 5, kind: input, shape index: {}]
  %s6 = inlined_call_operand.hbm [shape: f32[2,1,256], index: 6, kind: output, shape index: {}]
  %s7 = sld [smem:[#allocation0]]
  $region57: #{tpu_custom_call.1} parent=0
    _
  %s9 = ssub.s32 1, %s7
  %s10 = scalar_select 0, %s9, %s7
  %11 = sst [smem:[#allocation2]] %s5
  $region1: #{tpu_custom_call.1} parent=0
    #allocation3 [shape = 'u8[2048]{0}', space=vmem, size = 0x800, scoped, tag = 'output window, operand 0']
    #allocation4 [shape = 's32[2]{0}', space=sflag, size = 0x8, scoped, tag = 'scoped memory for tpu_custom_call.1']
    %12 = vsyncpa [#allocation4], 0
    %s13 = scalar_lea.sflag [#allocation4], 1
    %14 = vsyncpa %s13, 0
    loop: start=0, step=1, limit=4
    $region2: #{tpu_custom_call.1} parent=1 // loop_pre_header
      _
    $region3: #{tpu_custom_call.1} parent=1 // loop_header
      %s16 = sphi 0, %s20
      %p17 = scmp.ge.s32.totalorder %s16, 4
      %s26 = sphi 0, %s28
      %s29 = sphi 0, %s26
      %s30 = sphi 0, %s29
      %s46 = sphi 0, %s30
      %s52 = sphi 0, %s54
      %s55 = sphi 0, %s52
      %s56 = sphi 0, %s55
      %s72 = sphi 0, %s56
      %s76 = sphi 0, %s76
      %s78 = sphi 0, %s76
      %s79 = sphi 0, %s78
      %s93 = sphi 0, %s79
      %s97 = sphi 0, %s97
      %s99 = sphi 0, %s97
      %s100 = sphi 0, %s99
      %s114 = sphi 0, %s100
      %s118 = sphi 0, %s118
      %s120 = sphi 0, %s118
      %s121 = sphi 0, %s120
      %s135 = sphi 0, %s121
      %s139 = sphi 0, %s139
      %s141 = sphi 0, %s139
      %s142 = sphi 0, %s141
      %s156 = sphi 0, %s142
      %s162 = sphi 0, %s164
      %s165 = sphi 0, %s162
      %s166 = sphi 0, %s165
      %s182 = sphi 0, %s166
    $region4: #{tpu_custom_call.1} parent=1 // loop_header_branch
      %19 = sbr.rel (%p17) target = $region8
    $region5: #{tpu_custom_call.1} parent=1 // loop_body
      %s21 = ssub.s32 %s16, 1
      %s22 = ssub.s32 %s16, 2
      %s23 = sadd.s32 %s16, 1
      %s24 = ssub.s32 %s16, %s23
      %p25 = scmp.eq.s32.totalorder %s24, 0
      %s27 = sadd.s32 %s26, 1
      %s28 = scalar_select %p25, %s26, %s27
      %p31 = pneg %p25
      %p32 = scmp.eq.s32.totalorder %s16, 1
      %p33 = por %p31, %p32
      %p34 = scmp.ne.s32.totalorder %s26, %s29
      %p35 = scmp.eq.s32.totalorder %s16, 0
      %p36 = por %p34, %p35
      %p37 = scmp.ne.s32.totalorder %s26, %s29
      %p38 = scmp.eq.s32.totalorder %s21, 1
      %p39 = por %p37, %p38
      %p40 = scmp.ne.s32.totalorder %s29, %s30
      %p41 = scmp.eq.s32.totalorder %s21, 0
      %p42 = por %p40, %p41
      %p43 = scmp.ne.s32.totalorder %s29, %s30
      %p44 = scmp.eq.s32.totalorder %s22, 1
      %p45 = por %p43, %p44
      %p47 = scmp.ne.s32.totalorder %s30, %s46
      %p48 = scmp.eq.s32.totalorder %s22, 0
      %p49 = por %p47, %p48
      %s50 = ssub.s32 %s16, %s23
      %p51 = scmp.eq.s32.totalorder %s50, 0
      %s53 = sadd.s32 %s52, 1
      %s54 = scalar_select %p51, %s52, %s53
      %p57 = pneg %p51
      %p58 = scmp.eq.s32.totalorder %s16, 1
      %p59 = por %p57, %p58
      %p60 = scmp.ne.s32.totalorder %s52, %s55
      %p61 = scmp.eq.s32.totalorder %s16, 0
      %p62 = por %p60, %p61
      %p63 = scmp.ne.s32.totalorder %s52, %s55
      %p64 = scmp.eq.s32.totalorder %s21, 1
      %p65 = por %p63, %p64
      %p66 = scmp.ne.s32.totalorder %s55, %s56
      %p67 = scmp.eq.s32.totalorder %s21, 0
      %p68 = por %p66, %p67
      %p69 = scmp.ne.s32.totalorder %s55, %s56
      %p70 = scmp.eq.s32.totalorder %s22, 1
      %p71 = por %p69, %p70
      %p73 = scmp.ne.s32.totalorder %s56, %s72
      %p74 = scmp.eq.s32.totalorder %s22, 0
      %p75 = por %p73, %p74
      %s77 = sadd.s32 %s76, 1
      %p80 = scmp.eq.s32.totalorder %s16, 1
      %p81 = scmp.ne.s32.totalorder %s76, %s78
      %p82 = scmp.eq.s32.totalorder %s16, 0
      %p83 = por %p81, %p82
      %p84 = scmp.ne.s32.totalorder %s76, %s78
      %p85 = scmp.eq.s32.totalorder %s21, 1
      %p86 = por %p84, %p85
      %p87 = scmp.ne.s32.totalorder %s78, %s79
      %p88 = scmp.eq.s32.totalorder %s21, 0
      %p89 = por %p87, %p88
      %p90 = scmp.ne.s32.totalorder %s78, %s79
      %p91 = scmp.eq.s32.totalorder %s22, 1
      %p92 = por %p90, %p91
      %p94 = scmp.ne.s32.totalorder %s79, %s93
      %p95 = scmp.eq.s32.totalorder %s22, 0
      %p96 = por %p94, %p95
      %s98 = sadd.s32 %s97, 1
      %p101 = scmp.eq.s32.totalorder %s16, 1
      %p102 = scmp.ne.s32.totalorder %s97, %s99
      %p103 = scmp.eq.s32.totalorder %s16, 0
      %p104 = por %p102, %p103
      %p105 = scmp.ne.s32.totalorder %s97, %s99
      %p106 = scmp.eq.s32.totalorder %s21, 1
      %p107 = por %p105, %p106
      %p108 = scmp.ne.s32.totalorder %s99, %s100
      %p109 = scmp.eq.s32.totalorder %s21, 0
      %p110 = por %p108, %p109
      %p111 = scmp.ne.s32.totalorder %s99, %s100
      %p112 = scmp.eq.s32.totalorder %s22, 1
      %p113 = por %p111, %p112
      %p115 = scmp.ne.s32.totalorder %s100, %s114
      %p116 = scmp.eq.s32.totalorder %s22, 0
      %p117 = por %p115, %p116
      %s119 = sadd.s32 %s118, 1
      %p122 = scmp.eq.s32.totalorder %s16, 1
      %p123 = scmp.ne.s32.totalorder %s118, %s120
      %p124 = scmp.eq.s32.totalorder %s16, 0
      %p125 = por %p123, %p124
      %p126 = scmp.ne.s32.totalorder %s118, %s120
      %p127 = scmp.eq.s32.totalorder %s21, 1
      %p128 = por %p126, %p127
      %p129 = scmp.ne.s32.totalorder %s120, %s121
      %p130 = scmp.eq.s32.totalorder %s21, 0
      %p131 = por %p129, %p130
      %p132 = scmp.ne.s32.totalorder %s120, %s121
      %p133 = scmp.eq.s32.totalorder %s22, 1
      %p134 = por %p132, %p133
      %p136 = scmp.ne.s32.totalorder %s121, %s135
      %p137 = scmp.eq.s32.totalorder %s22, 0
      %p138 = por %p136, %p137
      %s140 = sadd.s32 %s139, 1
      %p143 = scmp.eq.s32.totalorder %s16, 1
      %p144 = scmp.ne.s32.totalorder %s139, %s141
      %p145 = scmp.eq.s32.totalorder %s16, 0
      %p146 = por %p144, %p145
      %p147 = scmp.ne.s32.totalorder %s139, %s141
      %p148 = scmp.eq.s32.totalorder %s21, 1
      %p149 = por %p147, %p148
      %p150 = scmp.ne.s32.totalorder %s141, %s142
      %p151 = scmp.eq.s32.totalorder %s21, 0
      %p152 = por %p150, %p151
      %p153 = scmp.ne.s32.totalorder %s141, %s142
      %p154 = scmp.eq.s32.totalorder %s22, 1
      %p155 = por %p153, %p154
      %p157 = scmp.ne.s32.totalorder %s142, %s156
      %p158 = scmp.eq.s32.totalorder %s22, 0
      %p159 = por %p157, %p158
      %s160 = ssub.s32 %s16, %s23
      %p161 = scmp.eq.s32.totalorder %s160, 0
      %s163 = sadd.s32 %s162, 1
      %s164 = scalar_select %p161, %s162, %s163
      %p167 = pneg %p161
      %p168 = scmp.eq.s32.totalorder %s16, 1
      %p169 = por %p167, %p168
      %p170 = scmp.ne.s32.totalorder %s162, %s165
      %p171 = scmp.eq.s32.totalorder %s16, 0
      %p172 = por %p170, %p171
      %p173 = scmp.ne.s32.totalorder %s162, %s165
      %p174 = scmp.eq.s32.totalorder %s21, 1
      %p175 = por %p173, %p174
      %p176 = scmp.ne.s32.totalorder %s165, %s166
      %p177 = scmp.eq.s32.totalorder %s21, 0
      %p178 = por %p176, %p177
      %p179 = scmp.ne.s32.totalorder %s165, %s166
      %p180 = scmp.eq.s32.totalorder %s22, 1
      %p181 = por %p179, %p180
      %p183 = scmp.ne.s32.totalorder %s166, %s182
      %p184 = scmp.eq.s32.totalorder %s22, 0
      %p185 = por %p183, %p184
      %p186 = scmp.le.s32.totalorder 1, %s16
      %p187 = scmp.lt.s32.totalorder %s16, 3
      %p188 = pnand %p186, %p187
      %p189 = pneg %p188
      // Predicated region
      $region9: #{tpu_custom_call.1} parent=5 // pred_check
        _
      $region10: #{tpu_custom_call.1} parent=5 // pred_check_branch
        %191 = sbr.rel (%p188) target = $region12
      $region11: #{tpu_custom_call.1} parent=5 // pred_region
        %s192 = ssub.s32 %s16, 1
        // Predicated region
        $region13: #{tpu_custom_call.1} parent=11 // pred_check
          %p193 = pneg %p89
        $region14: #{tpu_custom_call.1} parent=11 // pred_check_branch
          %195 = sbr.rel (%p193) target = $region16
        $region15: #{tpu_custom_call.1} parent=11 // pred_region
          _
        $region16: #{tpu_custom_call.1} parent=11 // pred_fallthru
          _
        // Predicated region
        $region17: #{tpu_custom_call.1} parent=11 // pred_check
          %p196 = pneg %p110
        $region18: #{tpu_custom_call.1} parent=11 // pred_check_branch
          %198 = sbr.rel (%p196) target = $region20
        $region19: #{tpu_custom_call.1} parent=11 // pred_region
          _
        $region20: #{tpu_custom_call.1} parent=11 // pred_fallthru
          _
        // Predicated region
        $region21: #{tpu_custom_call.1} parent=11 // pred_check
          %p199 = pneg %p131
        $region22: #{tpu_custom_call.1} parent=11 // pred_check_branch
          %201 = sbr.rel (%p199) target = $region24
        $region23: #{tpu_custom_call.1} parent=11 // pred_region
          _
        $region24: #{tpu_custom_call.1} parent=11 // pred_fallthru
          _
        // Predicated region
        $region25: #{tpu_custom_call.1} parent=11 // pred_check
          %p202 = pneg %p152
        $region26: #{tpu_custom_call.1} parent=11 // pred_check_branch
          %204 = sbr.rel (%p202) target = $region28
        $region27: #{tpu_custom_call.1} parent=11 // pred_region
          _
        $region28: #{tpu_custom_call.1} parent=11 // pred_fallthru
          _
      $region12: #{tpu_custom_call.1} parent=5 // pred_fallthru
        _
      %p205 = scmp.lt.s32.totalorder %s16, 2
      // Predicated region
      $region29: #{tpu_custom_call.1} parent=5 // pred_check
        %p206 = pneg %p205
      $region30: #{tpu_custom_call.1} parent=5 // pred_check_branch
        %208 = sbr.rel (%p206) target = $region32
      $region31: #{tpu_custom_call.1} parent=5 // pred_region
        // Predicated region
        $region33: #{tpu_custom_call.1} parent=31 // pred_check
          %p209 = pneg %p36
        $region34: #{tpu_custom_call.1} parent=31 // pred_check_branch
          %211 = sbr.rel (%p209) target = $region36
        $region35: #{tpu_custom_call.1} parent=31 // pred_region
          %p212 = scmp.lt.s32.totalorder %s16, 1
          %s213 = scalar_select %p212, %s16, 1
          %s214 = smul.addr %s213, 2
          %s215 = scalar_lea.vmem %s0, %s214
        $region36: #{tpu_custom_call.1} parent=31 // pred_fallthru
          _
        // Predicated region
        $region37: #{tpu_custom_call.1} parent=31 // pred_check
          %p216 = pneg %p62
        $region38: #{tpu_custom_call.1} parent=31 // pred_check_branch
          %218 = sbr.rel (%p216) target = $region40
        $region39: #{tpu_custom_call.1} parent=31 // pred_region
          %p219 = scmp.lt.s32.totalorder %s16, 1
          %s220 = scalar_select %p219, %s16, 1
          %s221 = smul.addr %s220, 2
          %s222 = scalar_lea.vmem %s1, %s221
        $region40: #{tpu_custom_call.1} parent=31 // pred_fallthru
          _
      $region32: #{tpu_custom_call.1} parent=5 // pred_fallthru
        _
      %p223 = scmp.le.s32.totalorder 1, %s16
      %p224 = scmp.lt.s32.totalorder %s16, 3
      %p225 = pnand %p223, %p224
      %p226 = pneg %p225
      // Predicated region
      $region41: #{tpu_custom_call.1} parent=5 // pred_check
        _
      $region42: #{tpu_custom_call.1} parent=5 // pred_check_branch
        %228 = sbr.rel (%p225) target = $region44
      $region43: #{tpu_custom_call.1} parent=5 // pred_region
        %s229 = ssub.s32 %s16, 1
        %p230 = scmp.lt.s32.totalorder %s21, 1
        %s231 = scalar_select %p230, %s21, 1
        %s232 = smul.addr %s231, 2
        %s233 = scalar_lea.vmem %s0, %s232
        %p234 = pneg %p42
        %p235 = pneg %p39
        %p236 = scmp.lt.s32.totalorder %s21, 1
        %s237 = scalar_select %p236, %s21, 1
        %s238 = smul.addr %s237, 2
        %s239 = scalar_lea.vmem %s1, %s238
        %p240 = pneg %p68
        %p241 = pneg %p65
        %p242 = pneg %p89
        %p243 = pneg %p86
        %p244 = pneg %p110
        %p245 = pneg %p107
        %p246 = pneg %p131
        %p247 = pneg %p128
        %p248 = pneg %p152
        %p249 = pneg %p149
        %p250 = pneg %p178
        %p251 = pneg %p175
        %s252 = sand.u32 %s165, 1
        %s253 = scalar_lea.sflag [#allocation4], %s252
        %s254 = sand.u32 %s165, 1
        %s255 = smul.addr %s254, 2
        %s256 = scalar_lea.vmem [#allocation3], %s255
        %p257 = scmp.lt.s32.totalorder %s21, 1
        %s258 = scalar_select %p257, %s21, 1
        %s259 = smul.addr %s258, 2
        %s260 = scalar_lea.vmem %s0, %s259
        %p261 = scmp.lt.s32.totalorder %s21, 1
        %s262 = scalar_select %p261, %s21, 1
        %s263 = smul.addr %s262, 2
        %s264 = scalar_lea.vmem %s1, %s263
        %v265 = vlaneseq
        %v266 = vshrl.u32 %v265, 7
        %v267 = vadd.s32 %v266, 8
        %v268 = vadd.s32 %v266, 16
        %v269 = vld [vmem:[%s260] sm:$0x3]
        %v270 = vlaneseq
        %v271 = vshrl.u32 %v270, 7
        %v272 = vsub.s32 0, %v271
        %v273 = vrot.slane %v269, %v272
        %v274 = vlaneseq
        %v275 = vshrl.u32 %v274, 7
        %v276 = vsub.s32 1, %v275
        %v277 = vrot.slane %v269, %v276
        %vm278 = vcmp.eq.s32.totalorder %v266, %v273
        %vm279 = vcmp.eq.s32.totalorder %v266, %v277
        %vm280 = vcmp.eq.s32.totalorder %v267, %v273
        %vm281 = vcmp.eq.s32.totalorder %v267, %v277
        %vm282 = vcmp.eq.s32.totalorder %v268, %v273
        %vm283 = vcmp.eq.s32.totalorder %v268, %v277
        %v284 = vsel %vm278, 1, 0
        %v285 = vsel %vm279, 1, 0
        %v286 = vsel %vm280, 1, 0
        %v287 = vsel %vm281, 1, 0
        %v288 = vsel %vm282, 1, 0
        %v289 = vsel %vm283, 1, 0
        %v290 = vcvt.s32.f32 %v284
        %v291 = vcvt.s32.f32 %v285
        %v292 = vcvt.s32.f32 %v286
        %v293 = vcvt.s32.f32 %v287
        %v294 = vcvt.s32.f32 %v288
        %v295 = vcvt.s32.f32 %v289
        %v296 = vld [vmem:[%s2] sm:$0xff]
        %v297 = vld [vmem:[%s2 + $0x8] sm:$0xff]
        %v298 = vld [vmem:[%s2 + $0x10] sm:$0xff]
        %v299 = vld [vmem:[%s2 + $0x18] sm:$0xff]
        %v300 = vld [vmem:[%s264] sm:$0x3]
        %v301 = vlaneseq
        %v302 = vshrl.u32 %v301, 7
        %v303 = vsub.s32 0, %v302
        %v304 = vrot.slane %v300, %v303
        %v305 = vlaneseq
        %v306 = vshrl.u32 %v305, 7
        %v307 = vsub.s32 1, %v306
        %v308 = vrot.slane %v300, %v307
        %vm309 = vcmp.eq.s32.totalorder %v266, %v304
        %vm310 = vcmp.eq.s32.totalorder %v266, %v308
        %vm311 = vcmp.eq.s32.totalorder %v267, %v304
        %vm312 = vcmp.eq.s32.totalorder %v267, %v308
        %vm313 = vcmp.eq.s32.totalorder %v268, %v304
        %vm314 = vcmp.eq.s32.totalorder %v268, %v308
        %v315 = vsel %vm309, 1, 0
        %v316 = vsel %vm310, 1, 0
        %v317 = vsel %vm311, 1, 0
        %v318 = vsel %vm312, 1, 0
        %v319 = vsel %vm313, 1, 0
        %v320 = vsel %vm314, 1, 0
        %v321 = vcvt.s32.f32 %v315
        %v322 = vcvt.s32.f32 %v316
        %v323 = vcvt.s32.f32 %v317
        %v324 = vcvt.s32.f32 %v318
        %v325 = vcvt.s32.f32 %v319
        %v326 = vcvt.s32.f32 %v320
        %v327 = vld [vmem:[%s3] sm:$0xff]
        %v328 = vld [vmem:[%s3 + $0x8] sm:$0xff]
        %v329 = vld [vmem:[%s3 + $0x10] sm:$0xff]
        %v330 = vld [vmem:[%s3 + $0x18] sm:$0xff]
        %vm331 = vcmask 195584
        %v333 = vsel %vm331, %v327, 0
        %v336 = vsel %vm331, %v328, 0
        %v339 = vsel %vm331, %v329, 0
        %v342 = vsel %vm331, %v330, 0
        %344 = vmatprep.subr.mxu0 0.0
        %345 = vmatpush1.msra.mxu0 0.0
        %346 = vmatprep.subr.mxu0 0.0
        %347 = vmatpush1.msra.mxu0 0.0
        %348 = vmatprep.subr.mxu0 0.0
        %349 = vmatpush1.msra.mxu0 0.0
        %350 = vmatprep.subr.mxu0 0.0
        %351 = vmatpush1.msra.mxu0 0.0
        %352 = vmatprep.subr.mxu0 0.0
        %353 = vmatpush1.msra.mxu0 0.0
        %354 = vmatprep.subr.mxu0 0.0
        %355 = vmatpush1.msra.mxu0 0.0
        %356 = vmatprep.subr.mxu0 0.0
        %357 = vmatpush1.msra.mxu0 0.0
        %358 = vmatprep.subr.mxu0 0.0
        %359 = vmatpush1.msra.mxu0 0.0
        %360 = vmatprep.subr.mxu0 0.0
        %361 = vmatpush1.msra.mxu0 0.0
        %362 = vmatprep.subr.mxu0 0.0
        %363 = vmatpush1.msra.mxu0 0.0
        %364 = vmatprep.subr.mxu0 0.0
        %365 = vmatpush1.msra.mxu0 0.0
        %366 = vmatprep.subr.mxu0 0.0
        %367 = vmatpush1.msra.mxu0 0.0
        %368 = vmatprep.subr.mxu0 0.0
        %369 = vmatpush1.msra.mxu0 0.0
        %370 = vmatprep.subr.mxu0 %v326
        %371 = vmatpush1.msra.mxu0 %v325
        %372 = vmatprep.subr.mxu0 %v324
        %373 = vmatpush1.msra.mxu0 %v323
        %374 = vmatprep.subr.mxu0 %v322
        %375 = vmatpush1.msra.mxu0 %v321
        %376 = vmatprep.subr.mxu0 0.0
        %377 = vmatpush2.msra.mxu0 0.0
        %378 = vmatprep.subr.mxu0 0.0
        %379 = vmatpush2.msra.mxu0 0.0
        %380 = vmatprep.subr.mxu0 0.0
        %381 = vmatpush2.msra.mxu0 0.0
        %382 = vmatprep.subr.mxu0 0.0
        %383 = vmatpush2.msra.mxu0 0.0
        %384 = vmatprep.subr.mxu0 0.0
        %385 = vmatpush2.msra.mxu0 0.0
        %386 = vmatprep.subr.mxu0 0.0
        %387 = vmatpush2.msra.mxu0 0.0
        %388 = vmatprep.subr.mxu0 0.0
        %389 = vmatpush2.msra.mxu0 0.0
        %390 = vmatprep.subr.mxu0 0.0
        %391 = vmatpush2.msra.mxu0 0.0
        %392 = vmatprep.subr.mxu0 0.0
        %393 = vmatpush2.msra.mxu0 0.0
        %394 = vmatprep.subr.mxu0 0.0
        %395 = vmatpush2.msra.mxu0 0.0
        %396 = vmatprep.subr.mxu0 0.0
        %397 = vmatpush2.msra.mxu0 0.0
        %398 = vmatprep.subr.mxu0 0.0
        %399 = vmatpush2.msra.mxu0 0.0
        %400 = vmatprep.subr.mxu0 0.0
        %401 = vmatpush2.msra.mxu0 0.0
        %402 = vmatprep.subr.mxu0 0.0
        %403 = vmatpush2.msra.mxu0 0.0
        %404 = vmatprep.subr.mxu0 0.0
        %405 = vmatpush2.msra.mxu0 0.0
        %406 = vmatprep.subr.mxu0 0.0
        %407 = vmatpush2.msra.mxu0 0.0
        %408 = vmatprep.mubr.f32.mxu0 0.0
        %409 = vmatmul.mubr.f32.gmra.mxu0 %v333
        %v410 = vpop.f32.mrf.mxu0
        %v411 = vadd.f32 0.0, %v410
        %v412 = vpop.f32.mrf.mxu0
        %v413 = vadd.f32 0.0, %v412
        %414 = vmatprep.mubr.f32.mxu0 0.0
        %415 = vmatmul.mubr.f32.gmra.mxu0 %v336
        %v416 = vpop.f32.mrf.mxu0
        %v417 = vadd.f32 0.0, %v416
        %v418 = vpop.f32.mrf.mxu0
        %v419 = vadd.f32 0.0, %v418
        %420 = vmatprep.mubr.f32.mxu0 0.0
        %421 = vmatmul.mubr.f32.gmra.mxu0 %v339
        %v422 = vpop.f32.mrf.mxu0
        %v423 = vadd.f32 0.0, %v422
        %v424 = vpop.f32.mrf.mxu0
        %v425 = vadd.f32 0.0, %v424
        %426 = vmatprep.mubr.f32.mxu0 0.0
        %427 = vmatmul.mubr.f32.gmra.mxu0 %v342
        %v428 = vpop.f32.mrf.mxu0
        %v429 = vadd.f32 0.0, %v428
        %v430 = vpop.f32.mrf.mxu0
        %v431 = vadd.f32 0.0, %v430
        %432 = vdwg.mxu0
        %v434 = vsel %vm331, %v296, 0
        %v437 = vsel %vm331, %v297, 0
        %v440 = vsel %vm331, %v298, 0
        %v443 = vsel %vm331, %v299, 0
        %445 = vmatprep.subr.mxu0 0.0
        %446 = vmatpush1.msra.mxu0 0.0
        %447 = vmatprep.subr.mxu0 0.0
        %448 = vmatpush1.msra.mxu0 0.0
        %449 = vmatprep.subr.mxu0 0.0
        %450 = vmatpush1.msra.mxu0 0.0
        %451 = vmatprep.subr.mxu0 0.0
        %452 = vmatpush1.msra.mxu0 0.0
        %453 = vmatprep.subr.mxu0 0.0
        %454 = vmatpush1.msra.mxu0 0.0
        %455 = vmatprep.subr.mxu0 0.0
        %456 = vmatpush1.msra.mxu0 0.0
        %457 = vmatprep.subr.mxu0 0.0
        %458 = vmatpush1.msra.mxu0 0.0
        %459 = vmatprep.subr.mxu0 0.0
        %460 = vmatpush1.msra.mxu0 0.0
        %461 = vmatprep.subr.mxu0 0.0
        %462 = vmatpush1.msra.mxu0 0.0
        %463 = vmatprep.subr.mxu0 0.0
        %464 = vmatpush1.msra.mxu0 0.0
        %465 = vmatprep.subr.mxu0 0.0
        %466 = vmatpush1.msra.mxu0 0.0
        %467 = vmatprep.subr.mxu0 0.0
        %468 = vmatpush1.msra.mxu0 0.0
        %469 = vmatprep.subr.mxu0 0.0
        %470 = vmatpush1.msra.mxu0 0.0
        %471 = vmatprep.subr.mxu0 %v295
        %472 = vmatpush1.msra.mxu0 %v294
        %473 = vmatprep.subr.mxu0 %v293
        %474 = vmatpush1.msra.mxu0 %v292
        %475 = vmatprep.subr.mxu0 %v291
        %476 = vmatpush1.msra.mxu0 %v290
        %477 = vmatprep.subr.mxu0 0.0
        %478 = vmatpush2.msra.mxu0 0.0
        %479 = vmatprep.subr.mxu0 0.0
        %480 = vmatpush2.msra.mxu0 0.0
        %481 = vmatprep.subr.mxu0 0.0
        %482 = vmatpush2.msra.mxu0 0.0
        %483 = vmatprep.subr.mxu0 0.0
        %484 = vmatpush2.msra.mxu0 0.0
        %485 = vmatprep.subr.mxu0 0.0
        %486 = vmatpush2.msra.mxu0 0.0
        %487 = vmatprep.subr.mxu0 0.0
        %488 = vmatpush2.msra.mxu0 0.0
        %489 = vmatprep.subr.mxu0 0.0
        %490 = vmatpush2.msra.mxu0 0.0
        %491 = vmatprep.subr.mxu0 0.0
        %492 = vmatpush2.msra.mxu0 0.0
        %493 = vmatprep.subr.mxu0 0.0
        %494 = vmatpush2.msra.mxu0 0.0
        %495 = vmatprep.subr.mxu0 0.0
        %496 = vmatpush2.msra.mxu0 0.0
        %497 = vmatprep.subr.mxu0 0.0
        %498 = vmatpush2.msra.mxu0 0.0
        %499 = vmatprep.subr.mxu0 0.0
        %500 = vmatpush2.msra.mxu0 0.0
        %501 = vmatprep.subr.mxu0 0.0
        %502 = vmatpush2.msra.mxu0 0.0
        %503 = vmatprep.subr.mxu0 0.0
        %504 = vmatpush2.msra.mxu0 0.0
        %505 = vmatprep.subr.mxu0 0.0
        %506 = vmatpush2.msra.mxu0 0.0
        %507 = vmatprep.subr.mxu0 0.0
        %508 = vmatpush2.msra.mxu0 0.0
        %509 = vmatprep.mubr.f32.mxu0 0.0
        %510 = vmatmul.mubr.f32.gmra.mxu0 %v434
        %v511 = vpop.f32.mrf.mxu0
        %v512 = vadd.f32 %v411, %v511
        %v513 = vpop.f32.mrf.mxu0
        %v514 = vadd.f32 %v413, %v513
        %515 = vmatprep.mubr.f32.mxu0 0.0
        %516 = vmatmul.mubr.f32.gmra.mxu0 %v437
        %v517 = vpop.f32.mrf.mxu0
        %v518 = vadd.f32 %v417, %v517
        %v519 = vpop.f32.mrf.mxu0
        %v520 = vadd.f32 %v419, %v519
        %521 = vmatprep.mubr.f32.mxu0 0.0
        %522 = vmatmul.mubr.f32.gmra.mxu0 %v440
        %v523 = vpop.f32.mrf.mxu0
        %v524 = vadd.f32 %v423, %v523
        %v525 = vpop.f32.mrf.mxu0
        %v526 = vadd.f32 %v425, %v525
        %527 = vmatprep.mubr.f32.mxu0 0.0
        %528 = vmatmul.mubr.f32.gmra.mxu0 %v443
        %v529 = vpop.f32.mrf.mxu0
        %v530 = vadd.f32 %v429, %v529
        %v531 = vpop.f32.mrf.mxu0
        %v532 = vadd.f32 %v431, %v531
        %533 = vdwg.mxu0
        %v534 = vmax.f32 %v512, 0.0
        %v535 = vmax.f32 %v514, 0.0
        %v536 = vmax.f32 %v518, 0.0
        %v537 = vmax.f32 %v520, 0.0
        %v538 = vmax.f32 %v524, 0.0
        %v539 = vmax.f32 %v526, 0.0
        %v540 = vmax.f32 %v530, 0.0
        %v541 = vmax.f32 %v532, 0.0
        %v542 = vld [vmem:[%s4] sm:$0x1]
        %s543 = sld [smem:[#allocation2]]
        %v544 = vstv %s543
        %vm545 = vcmask 261120
        %v547 = vsel %vm545, %v542, 0
        %549 = vmatprep.subr.mxu0 0.0
        %550 = vmatpush1.msra.mxu0 0.0
        %551 = vmatprep.subr.mxu0 0.0
        %552 = vmatpush1.msra.mxu0 0.0
        %553 = vmatprep.subr.mxu0 0.0
        %554 = vmatpush1.msra.mxu0 0.0
        %555 = vmatprep.subr.mxu0 0.0
        %556 = vmatpush1.msra.mxu0 0.0
        %557 = vmatprep.subr.mxu0 0.0
        %558 = vmatpush1.msra.mxu0 0.0
        %559 = vmatprep.subr.mxu0 0.0
        %560 = vmatpush1.msra.mxu0 0.0
        %561 = vmatprep.subr.mxu0 0.0
        %562 = vmatpush1.msra.mxu0 0.0
        %563 = vmatprep.subr.mxu0 0.0
        %564 = vmatpush1.msra.mxu0 0.0
        %565 = vmatprep.subr.mxu0 0.0
        %566 = vmatpush1.msra.mxu0 0.0
        %567 = vmatprep.subr.mxu0 0.0
        %568 = vmatpush1.msra.mxu0 0.0
        %569 = vmatprep.subr.mxu0 0.0
        %570 = vmatpush1.msra.mxu0 0.0
        %571 = vmatprep.subr.mxu0 0.0
        %572 = vmatpush1.msra.mxu0 0.0
        %573 = vmatprep.subr.mxu0 %v541
        %574 = vmatpush1.msra.mxu0 %v540
        %575 = vmatprep.subr.mxu0 %v539
        %576 = vmatpush1.msra.mxu0 %v538
        %577 = vmatprep.subr.mxu0 %v537
        %578 = vmatpush1.msra.mxu0 %v536
        %579 = vmatprep.subr.mxu0 %v535
        %580 = vmatpush1.msra.mxu0 %v534
        %581 = vmatprep.subr.mxu0 0.0
        %582 = vmatpush2.msra.mxu0 0.0
        %583 = vmatprep.subr.mxu0 0.0
        %584 = vmatpush2.msra.mxu0 0.0
        %585 = vmatprep.subr.mxu0 0.0
        %586 = vmatpush2.msra.mxu0 0.0
        %587 = vmatprep.subr.mxu0 0.0
        %588 = vmatpush2.msra.mxu0 0.0
        %589 = vmatprep.subr.mxu0 0.0
        %590 = vmatpush2.msra.mxu0 0.0
        %591 = vmatprep.subr.mxu0 0.0
        %592 = vmatpush2.msra.mxu0 0.0
        %593 = vmatprep.subr.mxu0 0.0
        %594 = vmatpush2.msra.mxu0 0.0
        %595 = vmatprep.subr.mxu0 0.0
        %596 = vmatpush2.msra.mxu0 0.0
        %597 = vmatprep.subr.mxu0 0.0
        %598 = vmatpush2.msra.mxu0 0.0
        %599 = vmatprep.subr.mxu0 0.0
        %600 = vmatpush2.msra.mxu0 0.0
        %601 = vmatprep.subr.mxu0 0.0
        %602 = vmatpush2.msra.mxu0 0.0
        %603 = vmatprep.subr.mxu0 0.0
        %604 = vmatpush2.msra.mxu0 0.0
        %605 = vmatprep.subr.mxu0 0.0
        %606 = vmatpush2.msra.mxu0 0.0
        %607 = vmatprep.subr.mxu0 0.0
        %608 = vmatpush2.msra.mxu0 0.0
        %609 = vmatprep.subr.mxu0 0.0
        %610 = vmatpush2.msra.mxu0 0.0
        %611 = vmatprep.subr.mxu0 0.0
        %612 = vmatpush2.msra.mxu0 0.0
        %613 = vmatprep.mubr.f32.mxu0 0.0
        %614 = vmatmul.mubr.f32.gmra.mxu0 %v547
        %v615 = vpop.f32.mrf.mxu0
        %v616 = vadd.f32 %v544, %v615
        %v617 = vpop.f32.mrf.mxu0
        %v618 = vadd.f32 %v544, %v617
        %619 = vdwg.mxu0
        %v622 = vcombine.low %v616, %v618
        %v624 = vunpack.c.l.s4 1966171168
        %v625 = vunpack.c.0.s8 %v624
        %v626 = vlaneseq
        %v627 = vshrl.u32 %v626, 7
        %v628 = vsub.s32 %v625, %v627
        %v629 = vrot.slane %v622, %v628
        %v631 = vunpack.c.l.s4 1966171168
        %v632 = vunpack.c.0.s8 %v631
        %v633 = vlaneseq
        %v634 = vshrl.u32 %v633, 7
        %v635 = vsub.s32 %v632, %v634
        %v636 = vrot.slane %v629, %v635
        %v638 = vlaneseq
        %vm639 = vcmp.ge.s32.totalorder %v638, 0
        %vm640 = vcmp.lt.s32.totalorder %v638, 256
        %vm641 = vmand %vm639, %vm640
        %642 = vst.msk [vmem:[%s256] sm:$0x3] %vm641, %v636
        %s643 = sand.u32 %s165, 1
        %s644 = scalar_lea.sflag [#allocation4], %s643
        %s645 = sand.u32 %s165, 1
        %s646 = smul.addr %s645, 2
        %s647 = scalar_lea.vmem [#allocation3], %s646
        // Predicated region
        $region45: #{tpu_custom_call.1} parent=43 // pred_check
          %p648 = pneg %p175
        $region46: #{tpu_custom_call.1} parent=43 // pred_check_branch
          %650 = sbr.rel (%p648) target = $region48
        $region47: #{tpu_custom_call.1} parent=43 // pred_region
          %s652 = ssub.s32 32, 32
          %653 = vsyncadd %s644, %s652
          %s654 = smul.addr %s21, 2
          %s655 = smul.addr %s654, 16
          %s656 = scalar_lea.hbm %s6, %s655
          %s658 = sshll.u32 %s647, 4
          %s659 = int_to_ptr.vmem [resolvable:$true] %s658
          %661 = dma.vmem_to_hbm [thread:$0]  %s659, 32, %s656, %s644
        $region48: #{tpu_custom_call.1} parent=43 // pred_fallthru
          _
      $region44: #{tpu_custom_call.1} parent=5 // pred_fallthru
        _
      %p662 = scmp.le.s32.totalorder 2, %s16
      // Predicated region
      $region49: #{tpu_custom_call.1} parent=5 // pred_check
        %p663 = pneg %p662
      $region50: #{tpu_custom_call.1} parent=5 // pred_check_branch
        %665 = sbr.rel (%p663) target = $region52
      $region51: #{tpu_custom_call.1} parent=5 // pred_region
        %s666 = ssub.s32 %s16, 2
        // Predicated region
        $region53: #{tpu_custom_call.1} parent=51 // pred_check
          %p667 = pneg %p181
        $region54: #{tpu_custom_call.1} parent=51 // pred_check_branch
          %669 = sbr.rel (%p667) target = $region56
        $region55: #{tpu_custom_call.1} parent=51 // pred_region
          %s670 = sand.u32 %s166, 1
          %s671 = scalar_lea.sflag [#allocation4], %s670
          %s672 = sand.u32 %s166, 1
          %s673 = smul.addr %s672, 2
          %s674 = scalar_lea.vmem [#allocation3], %s673
          %675 = dma.done %s671, 32
        $region56: #{tpu_custom_call.1} parent=51 // pred_fallthru
          _
      $region52: #{tpu_custom_call.1} parent=5 // pred_fallthru
        _
    $region6: #{tpu_custom_call.1} parent=1 // loop_footer
      %s20 = sadd.s32 1, %s16
    $region7: #{tpu_custom_call.1} parent=1 // loop_footer_branch
      %15 = sbr.rel target = $region3
    $region8: #{tpu_custom_call.1} parent=1 // loop_exit
      _
    %676 = vsyncpa [#allocation4], 1
    %s677 = scalar_lea.sflag [#allocation4], 1
    %678 = vsyncpa %s677, 1

</llo_original>
